<compile_context>
chip_gen: v7x
topology: tpu7x:2x2x1
jax: 0.10.0
libtpu: 0.0.40
codegen_flags: <defaults>
</compile_context>

<pallas_src>
import functools

import jax
import jax.numpy as jnp
from jax.experimental import pallas as pl
from jax.experimental.pallas import tpu as pltpu


def _attn_body(q_ref, k_ref, v_ref, drop_ref, o_ref, *, inv_scale, mxu_dtype):
    """Whole-problem attention body: single invocation, everything in VMEM."""
    q = q_ref[...]
    # Fold 1/scale into q: O(B*Lq*D) VPU mults instead of O(B*Lq*Lk) on scores.
    if inv_scale != 1.0:
        q = q * jnp.asarray(inv_scale, dtype=q.dtype)

    # MXU operands in bf16 (f32 accumulation) — native MXU dtype on v5e/v6e/v7x.
    qm = q.astype(mxu_dtype)
    km = k_ref[...].astype(mxu_dtype)

    # scores: (B, Lq, Lk), f32 accumulation on the MXU.
    s = jnp.einsum("bqd,bkd->bqk", qm, km, preferred_element_type=jnp.float32)

    # Numerically-stable softmax over keys, batched across B in one pass.
    # Epilogue stays f32 (v5e VPU/EUP have no bf16 support).
    m = jnp.max(s, axis=-1, keepdims=True)
    e = jnp.exp(s - m)
    denom = jnp.sum(e, axis=-1, keepdims=True)
    probs = e / denom  # exact divide (tiny vector; keeps parity with reference)

    if drop_ref is not None:
        # Pre-scaled keep mask {0, 1/(1-p)} drawn in the wrapper: one VPU mul.
        probs = probs * drop_ref[...]

    vm = v_ref[...].astype(mxu_dtype)
    o = jnp.einsum("bqk,bkd->bqd", probs.astype(mxu_dtype), vm,
                   preferred_element_type=jnp.float32)
    o_ref[...] = o.astype(o_ref.dtype)


def _attn_kernel(q_ref, k_ref, v_ref, o_ref, *, inv_scale, mxu_dtype):
    _attn_body(q_ref, k_ref, v_ref, None, o_ref,
               inv_scale=inv_scale, mxu_dtype=mxu_dtype)


def _attn_dropout_kernel(q_ref, k_ref, v_ref, drop_ref, o_ref, *,
                         inv_scale, mxu_dtype):
    _attn_body(q_ref, k_ref, v_ref, drop_ref, o_ref,
               inv_scale=inv_scale, mxu_dtype=mxu_dtype)


def attention(query, key, value, scale_factor, dropout_p, *,
              rng_key=None, use_bf16_mxu=True):
    """Pallas equivalent of Model.forward(query, key, value, scale, dropout_p)."""
    B, Lq, D = query.shape
    Bk, Lk, Dk = key.shape
    assert (B, D) == (Bk, Dk) and value.shape == key.shape
    dropout_p = float(dropout_p)
    scale_factor = float(scale_factor)

    # F.dropout(p=1) deterministically zeroes its input, so the whole output is
    # zero: an XLA constant broadcast is free and fuses with consumers — no
    # kernel launch, no DMA, no compute.
    if dropout_p >= 1.0:
        return jnp.zeros((B, Lq, D), dtype=query.dtype)

    mxu_dtype = jnp.bfloat16 if use_bf16_mxu else query.dtype
    kern_kw = dict(inv_scale=1.0 / scale_factor, mxu_dtype=mxu_dtype)

    vmem = pl.BlockSpec(memory_space=pltpu.MemorySpace.VMEM)
    out_shape = jax.ShapeDtypeStruct((B, Lq, D), query.dtype)
    itemsize = query.dtype.itemsize
    flops = 4 * B * Lq * Lk * D                  # two matmuls
    transcendentals = B * Lq * Lk                # softmax exp
    io_bytes = (query.size + key.size + value.size + B * Lq * D) * itemsize

    if dropout_p == 0.0:
        # No dropout: no mask operand, no grid, no scalar prefetch — the whole
        # (tiny) problem lives in VMEM for one kernel invocation.
        return pl.pallas_call(
            functools.partial(_attn_kernel, **kern_kw),
            out_shape=out_shape,
            in_specs=[vmem, vmem, vmem],
            out_specs=vmem,
            cost_estimate=pl.CostEstimate(
                flops=flops, transcendentals=transcendentals,
                bytes_accessed=io_bytes),
        )(query, key, value)

    # 0 < p < 1: keep-mask is drawn with jax.random in the wrapper (portable
    # across backends; the RNG stream intentionally differs from PyTorch),
    # pre-scaled to {0, 1/(1-p)} so the kernel applies dropout with one multiply.
    if rng_key is None:
        rng_key = jax.random.PRNGKey(0)
    keep = jax.random.bernoulli(rng_key, 1.0 - dropout_p, (B, Lq, Lk))
    drop_scale = keep.astype(jnp.float32) * jnp.float32(1.0 / (1.0 - dropout_p))

    return pl.pallas_call(
        functools.partial(_attn_dropout_kernel, **kern_kw),
        out_shape=out_shape,
        in_specs=[vmem, vmem, vmem, vmem],
        out_specs=vmem,
        cost_estimate=pl.CostEstimate(
            flops=flops, transcendentals=transcendentals,
            bytes_accessed=io_bytes + drop_scale.size * 4),
    )(query, key, value, drop_scale)


def _reference(query, key, value, scale_factor, dropout_p, drop_scale=None):
    s = jnp.einsum("bqd,bkd->bqk", query, key) / float(scale_factor)
    p = jax.nn.softmax(s, axis=-1)
    if float(dropout_p) >= 1.0:
        p = jnp.zeros_like(p)
    elif drop_scale is not None:
        p = p * drop_scale
    return jnp.einsum("bqk,bkd->bqd", p, value)


if __name__ == "__main__":
    dim_model = 32
    scale_factor = 1
    dropout_p = 1  # module configuration from the PyTorch script

    k0, k1, k2 = jax.random.split(jax.random.PRNGKey(0), 3)
    query = jax.random.normal(k0, (2, 10, dim_model), dtype=jnp.float32)
    key = jax.random.normal(k1, (2, 15, dim_model), dtype=jnp.float32)
    value = jax.random.normal(k2, (2, 15, dim_model), dtype=jnp.float32)

    # 1) Module configuration: dropout_p=1 -> output is deterministically zero.
    out = jax.block_until_ready(
        attention(query, key, value, scale_factor, dropout_p))
    ref = _reference(query, key, value, scale_factor, dropout_p)
    assert out.shape == (2, 10, dim_model)
    assert jnp.allclose(out, ref), "mismatch at dropout_p=1"

    # 2) Attention math with dropout disabled, exact f32 MXU operands.
    out_f32 = jax.block_until_ready(
        attention(query, key, value, scale_factor, 0.0, use_bf16_mxu=False))
    ref0 = _reference(query, key, value, scale_factor, 0.0)
    assert jnp.allclose(out_f32, ref0, atol=1e-3, rtol=1e-3), "f32 mismatch at p=0"

    # 3) Default fast path: bf16 MXU operands with f32 accumulation/softmax.
    out_bf16 = jax.block_until_ready(
        attention(query, key, value, scale_factor, 0.0))
    assert jnp.allclose(out_bf16, ref0, atol=1e-1, rtol=1e-1), "bf16 mismatch at p=0"

    # 4) Stochastic dropout path: the mask is drawn in the wrapper from a known
    #    key, so the reference can reproduce it exactly.
    p = 0.5
    rk = jax.random.PRNGKey(7)
    out_drop = jax.block_until_ready(
        attention(query, key, value, scale_factor, p, rng_key=rk,
                  use_bf16_mxu=False))
    keep = jax.random.bernoulli(rk, 1.0 - p, (2, 10, 15)).astype(jnp.float32)
    ref_drop = _reference(query, key, value, scale_factor, p,
                          drop_scale=keep / (1.0 - p))
    assert jnp.allclose(out_drop, ref_drop, atol=1e-3, rtol=1e-3), "dropout mismatch"

    print("KERNEL_OK")
</pallas_src>

<mosaic_0001>
module attributes {stable_mosaic.version = 11 : i64} {
  func.func @_attn_kernel(%arg0: memref<2x10x32xf32, #tpu.memory_space<vmem>>, %arg1: memref<2x15x32xf32, #tpu.memory_space<vmem>>, %arg2: memref<2x15x32xf32, #tpu.memory_space<vmem>>, %arg3: memref<2x10x32xf32, #tpu.memory_space<vmem>>) attributes {dimension_semantics = [], scalar_prefetch = 0 : i64, scratch_operands = 0 : i64, tpu.core_type = #tpu.core_type<tc>} {
    %c0 = arith.constant 0 : index
    %c0_0 = arith.constant 0 : index
    %c0_1 = arith.constant 0 : index
    %0 = vector.load %arg0[%c0, %c0_0, %c0_1] : memref<2x10x32xf32, #tpu.memory_space<vmem>>, vector<2x10x32xf32>
    %c0_2 = arith.constant 0 : index
    %c0_3 = arith.constant 0 : index
    %c0_4 = arith.constant 0 : index
    %1 = vector.load %arg1[%c0_2, %c0_3, %c0_4] : memref<2x15x32xf32, #tpu.memory_space<vmem>>, vector<2x15x32xf32>
    "tpu.trace_start"() <{level = 10 : i32, message = "bqd,bkd->bqk"}> : () -> ()
    %cst = arith.constant dense<0.000000e+00> : vector<2x10x15xf32>
    %2 = tpu.matmul %0, %1, %cst {dimension_numbers = #tpu.dot_dimension_numbers<[2], [2], [1], [1], [0, 0, 0, 1, 1, 1], [0], [0]>} : vector<2x10x32xf32>, vector<2x15x32xf32>, vector<2x10x15xf32> -> vector<2x10x15xf32>
    "tpu.trace_stop"() : () -> ()
    %cst_5 = arith.constant dense<0xFF800000> : vector<2x10xf32>
    %3 = vector.multi_reduction <maximumf>, %2, %cst_5 [2] : vector<2x10x15xf32> to vector<2x10xf32>
    %4 = vector.shape_cast %3 : vector<2x10xf32> to vector<2x10x1xf32>
    %5 = vector.broadcast %4 : vector<2x10x1xf32> to vector<2x10x15xf32>
    %6 = arith.subf %2, %5 : vector<2x10x15xf32>
    %7 = math.exp %6 : vector<2x10x15xf32>
    %cst_6 = arith.constant dense<0.000000e+00> : vector<2x10xf32>
    %8 = vector.multi_reduction <add>, %7, %cst_6 [2] : vector<2x10x15xf32> to vector<2x10xf32>
    %9 = vector.shape_cast %8 : vector<2x10xf32> to vector<2x10x1xf32>
    %10 = vector.broadcast %9 : vector<2x10x1xf32> to vector<2x10x15xf32>
    %11 = arith.divf %7, %10 : vector<2x10x15xf32>
    %c0_7 = arith.constant 0 : index
    %c0_8 = arith.constant 0 : index
    %c0_9 = arith.constant 0 : index
    %12 = vector.load %arg2[%c0_7, %c0_8, %c0_9] : memref<2x15x32xf32, #tpu.memory_space<vmem>>, vector<2x15x32xf32>
    "tpu.trace_start"() <{level = 10 : i32, message = "bqk,bkd->bqd"}> : () -> ()
    %cst_10 = arith.constant dense<0.000000e+00> : vector<2x10x32xf32>
    %13 = tpu.matmul %11, %12, %cst_10 {dimension_numbers = #tpu.dot_dimension_numbers<[2], [1], [1], [2], [0, 0, 0, 1, 1, 2], [0], [0]>} : vector<2x10x15xf32>, vector<2x15x32xf32>, vector<2x10x32xf32> -> vector<2x10x32xf32>
    "tpu.trace_stop"() : () -> ()
    %c0_11 = arith.constant 0 : index
    %c0_12 = arith.constant 0 : index
    %c0_13 = arith.constant 0 : index
    %14 = vector.load %arg3[%c0_11, %c0_12, %c0_13] : memref<2x10x32xf32, #tpu.memory_space<vmem>>, vector<2x10x32xf32>
    tpu.vector_store %arg3[%c0_11, %c0_12, %c0_13], %13 {strides = array<i32>} : memref<2x10x32xf32, #tpu.memory_space<vmem>>, vector<2x10x32xf32>,
    return
  }
}

</mosaic_0001>

<llo_original>
// kernel: tpu_custom_call.1
$region0: #{tpu_custom_call.1}
  #allocation0 [shape = 'u32[]', space=smem, size = 0x4, offset = 0x4, fixed_abs, tag = 'smem constant byte address 0x4 - core index']
  #allocation1 [shape = 'u32[144,128]{1,0:T(1,128)}', space=vmem, size = 0x12000, scoped, tag = 'internal scratch']
  %s0 = inlined_call_operand.vmem [shape: f32[2,10,32], index: 0, kind: input, shape index: {}]
  %s1 = inlined_call_operand.vmem [shape: f32[2,15,32], index: 1, kind: input, shape index: {}]
  %s2 = inlined_call_operand.vmem [shape: f32[2,15,32], index: 2, kind: input, shape index: {}]
  %s3 = inlined_call_operand.vmem [shape: f32[2,10,32], index: 3, kind: output, shape index: {}]
  %s4 = sld [smem:[#allocation0]]
  $region22: #{tpu_custom_call.1} parent=0
    _
  %s6 = ssub.s32 1, %s4
  %s7 = scalar_select 0, %s6, %s4
  // Predicated region
  $region2: #{tpu_custom_call.1} parent=0 // pred_check
    _
  $region3: #{tpu_custom_call.1} parent=0 // pred_check_branch
    %9 = sbr.rel (0) target = $region5
  $region4: #{tpu_custom_call.1} parent=0 // pred_region
    _
  $region5: #{tpu_custom_call.1} parent=0 // pred_fallthru
    _
  // Predicated region
  $region6: #{tpu_custom_call.1} parent=0 // pred_check
    _
  $region7: #{tpu_custom_call.1} parent=0 // pred_check_branch
    %11 = sbr.rel (0) target = $region9
  $region8: #{tpu_custom_call.1} parent=0 // pred_region
    _
  $region9: #{tpu_custom_call.1} parent=0 // pred_fallthru
    _
  // Predicated region
  $region10: #{tpu_custom_call.1} parent=0 // pred_check
    _
  $region11: #{tpu_custom_call.1} parent=0 // pred_check_branch
    %13 = sbr.rel (0) target = $region13
  $region12: #{tpu_custom_call.1} parent=0 // pred_region
    _
  $region13: #{tpu_custom_call.1} parent=0 // pred_fallthru
    _
  %v14 = vld [vmem:[%s0] sm:$0xff]
  %v15 = vld [vmem:[%s0 + $0x8] sm:$0x3]
  %v16 = vld [vmem:[%s0 + $0x10] sm:$0xff]
  %v17 = vld [vmem:[%s0 + $0x18] sm:$0x3]
  %v18 = vld [vmem:[%s1] sm:$0xff]
  %v19 = vld [vmem:[%s1 + $0x8] sm:$0x7f]
  %v20 = vld [vmem:[%s1 + $0x10] sm:$0xff]
  %v21 = vld [vmem:[%s1 + $0x18] sm:$0x7f]
  %vm22 = vcmask 261120
  %v24 = vsel %vm22, %v14, 0
  %v27 = vsel %vm22, %v15, 0
  %v30 = vsel %vm22, %v18, 0
  %v33 = vsel %vm22, %v19, 0
  %35 = vmatprep.subr.mxu0 0.0
  %36 = vmatpush1.xpose.msra.mxu0 %v30
  %37 = vmatprep.subr.mxu0 0.0
  %38 = vmatpush1.xpose.msra.mxu0 %v33
  %39 = vmatprep.subr.mxu0 0.0
  %40 = vmatpush1.xpose.msra.mxu0 0.0
  %41 = vmatprep.subr.mxu0 0.0
  %42 = vmatpush1.xpose.msra.mxu0 0.0
  %43 = vmatprep.subr.mxu0 0.0
  %44 = vmatpush1.xpose.msra.mxu0 0.0
  %45 = vmatprep.subr.mxu0 0.0
  %46 = vmatpush1.xpose.msra.mxu0 0.0
  %47 = vmatprep.subr.mxu0 0.0
  %48 = vmatpush1.xpose.msra.mxu0 0.0
  %49 = vmatprep.subr.mxu0 0.0
  %50 = vmatpush1.xpose.msra.mxu0 0.0
  %51 = vmatprep.subr.mxu0 0.0
  %52 = vmatpush1.xpose.msra.mxu0 0.0
  %53 = vmatprep.subr.mxu0 0.0
  %54 = vmatpush1.xpose.msra.mxu0 0.0
  %55 = vmatprep.subr.mxu0 0.0
  %56 = vmatpush1.xpose.msra.mxu0 0.0
  %57 = vmatprep.subr.mxu0 0.0
  %58 = vmatpush1.xpose.msra.mxu0 0.0
  %59 = vmatprep.subr.mxu0 0.0
  %60 = vmatpush1.xpose.msra.mxu0 0.0
  %61 = vmatprep.subr.mxu0 0.0
  %62 = vmatpush1.xpose.msra.mxu0 0.0
  %63 = vmatprep.subr.mxu0 0.0
  %64 = vmatpush1.xpose.msra.mxu0 0.0
  %65 = vmatprep.subr.mxu0 0.0
  %66 = vmatpush1.xpose.msra.mxu0 0.0
  %67 = vmatprep.subr.mxu0 0.0
  %68 = vmatpush1.xpose.msra.mxu0 0.0
  %69 = vmatprep.subr.mxu0 0.0
  %70 = vmatpush1.xpose.msra.mxu0 0.0
  %71 = vmatprep.subr.mxu0 0.0
  %72 = vmatpush1.xpose.msra.mxu0 0.0
  %73 = vmatprep.subr.mxu0 0.0
  %74 = vmatpush1.xpose.msra.mxu0 0.0
  %75 = vmatprep.subr.mxu0 0.0
  %76 = vmatpush1.xpose.msra.mxu0 0.0
  %77 = vmatprep.subr.mxu0 0.0
  %78 = vmatpush1.xpose.msra.mxu0 0.0
  %79 = vmatprep.subr.mxu0 0.0
  %80 = vmatpush1.xpose.msra.mxu0 0.0
  %81 = vmatprep.subr.mxu0 0.0
  %82 = vmatpush1.xpose.msra.mxu0 0.0
  %83 = vmatprep.subr.mxu0 0.0
  %84 = vmatpush1.xpose.msra.mxu0 0.0
  %85 = vmatprep.subr.mxu0 0.0
  %86 = vmatpush1.xpose.msra.mxu0 0.0
  %87 = vmatprep.subr.mxu0 0.0
  %88 = vmatpush1.xpose.msra.mxu0 0.0
  %89 = vmatprep.subr.mxu0 0.0
  %90 = vmatpush1.xpose.msra.mxu0 0.0
  %91 = vmatprep.subr.mxu0 0.0
  %92 = vmatpush1.xpose.msra.mxu0 0.0
  %93 = vmatprep.subr.mxu0 0.0
  %94 = vmatpush1.xpose.msra.mxu0 0.0
  %95 = vmatprep.subr.mxu0 0.0
  %96 = vmatpush1.xpose.msra.mxu0 0.0
  %97 = vmatprep.subr.mxu0 0.0
  %98 = vmatpush1.xpose.msra.mxu0 0.0
  %99 = vmatprep.mubr.f32.mxu0 0.0
  %100 = vmatmul.mubr.f32.gmra.mrb[0].mxu0 %v24
  %v101 = vpop.f32.mrb[0].mxu0
  %v102 = vadd.f32 0.0, %v101
  %v103 = vpop.f32.mrb[0].mxu0
  %104 = vmatprep.mubr.f32.mxu0 0.0
  %105 = vmatmul.mubr.f32.gmra.mrb[0].mxu0 %v27
  %v106 = vpop.f32.mrb[0].mxu0
  %v107 = vadd.f32 0.0, %v106
  %v108 = vpop.f32.mrb[0].mxu0
  %109 = vdwg.mxu0
  %v111 = vsel %vm22, %v16, 0
  %v114 = vsel %vm22, %v17, 0
  %v117 = vsel %vm22, %v20, 0
  %v120 = vsel %vm22, %v21, 0
  %122 = vmatprep.subr.mxu0 0.0
  %123 = vmatpush1.xpose.msra.mxu0 %v117
  %124 = vmatprep.subr.mxu0 0.0
  %125 = vmatpush1.xpose.msra.mxu0 %v120
  %126 = vmatprep.subr.mxu0 0.0
  %127 = vmatpush1.xpose.msra.mxu0 0.0
  %128 = vmatprep.subr.mxu0 0.0
  %129 = vmatpush1.xpose.msra.mxu0 0.0
  %130 = vmatprep.subr.mxu0 0.0
  %131 = vmatpush1.xpose.msra.mxu0 0.0
  %132 = vmatprep.subr.mxu0 0.0
  %133 = vmatpush1.xpose.msra.mxu0 0.0
  %134 = vmatprep.subr.mxu0 0.0
  %135 = vmatpush1.xpose.msra.mxu0 0.0
  %136 = vmatprep.subr.mxu0 0.0
  %137 = vmatpush1.xpose.msra.mxu0 0.0
  %138 = vmatprep.subr.mxu0 0.0
  %139 = vmatpush1.xpose.msra.mxu0 0.0
  %140 = vmatprep.subr.mxu0 0.0
  %141 = vmatpush1.xpose.msra.mxu0 0.0
  %142 = vmatprep.subr.mxu0 0.0
  %143 = vmatpush1.xpose.msra.mxu0 0.0
  %144 = vmatprep.subr.mxu0 0.0
  %145 = vmatpush1.xpose.msra.mxu0 0.0
  %146 = vmatprep.subr.mxu0 0.0
  %147 = vmatpush1.xpose.msra.mxu0 0.0
  %148 = vmatprep.subr.mxu0 0.0
  %149 = vmatpush1.xpose.msra.mxu0 0.0
  %150 = vmatprep.subr.mxu0 0.0
  %151 = vmatpush1.xpose.msra.mxu0 0.0
  %152 = vmatprep.subr.mxu0 0.0
  %153 = vmatpush1.xpose.msra.mxu0 0.0
  %154 = vmatprep.subr.mxu0 0.0
  %155 = vmatpush1.xpose.msra.mxu0 0.0
  %156 = vmatprep.subr.mxu0 0.0
  %157 = vmatpush1.xpose.msra.mxu0 0.0
  %158 = vmatprep.subr.mxu0 0.0
  %159 = vmatpush1.xpose.msra.mxu0 0.0
  %160 = vmatprep.subr.mxu0 0.0
  %161 = vmatpush1.xpose.msra.mxu0 0.0
  %162 = vmatprep.subr.mxu0 0.0
  %163 = vmatpush1.xpose.msra.mxu0 0.0
  %164 = vmatprep.subr.mxu0 0.0
  %165 = vmatpush1.xpose.msra.mxu0 0.0
  %166 = vmatprep.subr.mxu0 0.0
  %167 = vmatpush1.xpose.msra.mxu0 0.0
  %168 = vmatprep.subr.mxu0 0.0
  %169 = vmatpush1.xpose.msra.mxu0 0.0
  %170 = vmatprep.subr.mxu0 0.0
  %171 = vmatpush1.xpose.msra.mxu0 0.0
  %172 = vmatprep.subr.mxu0 0.0
  %173 = vmatpush1.xpose.msra.mxu0 0.0
  %174 = vmatprep.subr.mxu0 0.0
  %175 = vmatpush1.xpose.msra.mxu0 0.0
  %176 = vmatprep.subr.mxu0 0.0
  %177 = vmatpush1.xpose.msra.mxu0 0.0
  %178 = vmatprep.subr.mxu0 0.0
  %179 = vmatpush1.xpose.msra.mxu0 0.0
  %180 = vmatprep.subr.mxu0 0.0
  %181 = vmatpush1.xpose.msra.mxu0 0.0
  %182 = vmatprep.subr.mxu0 0.0
  %183 = vmatpush1.xpose.msra.mxu0 0.0
  %184 = vmatprep.subr.mxu0 0.0
  %185 = vmatpush1.xpose.msra.mxu0 0.0
  %186 = vmatprep.mubr.f32.mxu0 0.0
  %187 = vmatmul.mubr.f32.gmra.mrb[0].mxu0 %v111
  %v188 = vpop.f32.mrb[0].mxu0
  %v189 = vadd.f32 0.0, %v188
  %v190 = vpop.f32.mrb[0].mxu0
  %191 = vmatprep.mubr.f32.mxu0 0.0
  %192 = vmatmul.mubr.f32.gmra.mrb[0].mxu0 %v114
  %v193 = vpop.f32.mrb[0].mxu0
  %v194 = vadd.f32 0.0, %v193
  %v195 = vpop.f32.mrb[0].mxu0
  %196 = vdwg.mxu0
  %vm197 = vcmask 121856
  %v198 = vsel %vm197, %v102, -inf
  %199 = vmax.xlane.f32.xlu0 %v198
  %v200 = vpop.xlane.xlu0 %199
  %vm201 = vcmask 115712
  %v202 = vsel %vm201, %v107, -inf
  %203 = vmax.xlane.f32.xlu0 %v202
  %v204 = vpop.xlane.xlu0 %203
  %v205 = vsel %vm197, %v189, -inf
  %206 = vmax.xlane.f32.xlu0 %v205
  %v207 = vpop.xlane.xlu0 %206
  %v208 = vsel %vm201, %v194, -inf
  %209 = vmax.xlane.f32.xlu0 %v208
  %v210 = vpop.xlane.xlu0 %209
  %v211 = vsub.f32 %v102, %v200
  %v212 = vsub.f32 %v107, %v204
  %v213 = vsub.f32 %v189, %v207
  %v214 = vsub.f32 %v194, %v210
  %v215 = vmul.f32 %v211, 1.442695
  %v216 = vpow.pop %v215
  %v217 = vmul.f32 %v212, 1.442695
  %v218 = vpow.pop %v217
  %v219 = vmul.f32 %v213, 1.442695
  %v220 = vpow.pop %v219
  %v221 = vmul.f32 %v214, 1.442695
  %v222 = vpow.pop %v221
  %v223 = vsel %vm197, %v216, 0.0
  %224 = vadd.xlane.f32.xlu0 %v223
  %v225 = vpop.xlane.xlu0 %224
  %v226 = vsel %vm201, %v218, 0.0
  %227 = vadd.xlane.f32.xlu0 %v226
  %v228 = vpop.xlane.xlu0 %227
  %v229 = vsel %vm197, %v220, 0.0
  %230 = vadd.xlane.f32.xlu0 %v229
  %v231 = vpop.xlane.xlu0 %230
  %v232 = vsel %vm201, %v222, 0.0
  %233 = vadd.xlane.f32.xlu0 %v232
  %v234 = vpop.xlane.xlu0 %233
  %v235 = vrcp.pop %v225
  %v236 = vmul.f32 %v216, %v235
  %v237 = vrcp.pop %v228
  %v238 = vmul.f32 %v218, %v237
  %v239 = vrcp.pop %v231
  %v240 = vmul.f32 %v220, %v239
  %v241 = vrcp.pop %v234
  %v242 = vmul.f32 %v222, %v241
  %v243 = vld [vmem:[%s2] sm:$0xff]
  %v244 = vld [vmem:[%s2 + $0x8] sm:$0x7f]
  %v245 = vld [vmem:[%s2 + $0x10] sm:$0xff]
  %v246 = vld [vmem:[%s2 + $0x18] sm:$0x7f]
  %v248 = vsel %vm197, %v236, 0
  %v251 = vsel %vm197, %v238, 0
  %vm253 = vcmask 1046528
  %v255 = vsel %vm253, %v244, 0
  %257 = vmatprep.subr.mxu0 0.0
  %258 = vmatpush1.msra.mxu0 %v243
  %259 = vmatprep.subr.mxu0 0.0
  %260 = vmatpush1.msra.mxu0 %v255
  %261 = vmatprep.subr.mxu0 0.0
  %262 = vmatpush1.msra.mxu0 0.0
  %263 = vmatprep.subr.mxu0 0.0
  %264 = vmatpush1.msra.mxu0 0.0
  %265 = vmatprep.subr.mxu0 0.0
  %266 = vmatpush1.msra.mxu0 0.0
  %267 = vmatprep.subr.mxu0 0.0
  %268 = vmatpush1.msra.mxu0 0.0
  %269 = vmatprep.subr.mxu0 0.0
  %270 = vmatpush1.msra.mxu0 0.0
  %271 = vmatprep.subr.mxu0 0.0
  %272 = vmatpush1.msra.mxu0 0.0
  %273 = vmatprep.subr.mxu0 0.0
  %274 = vmatpush1.msra.mxu0 0.0
  %275 = vmatprep.subr.mxu0 0.0
  %276 = vmatpush1.msra.mxu0 0.0
  %277 = vmatprep.subr.mxu0 0.0
  %278 = vmatpush1.msra.mxu0 0.0
  %279 = vmatprep.subr.mxu0 0.0
  %280 = vmatpush1.msra.mxu0 0.0
  %281 = vmatprep.subr.mxu0 0.0
  %282 = vmatpush1.msra.mxu0 0.0
  %283 = vmatprep.subr.mxu0 0.0
  %284 = vmatpush1.msra.mxu0 0.0
  %285 = vmatprep.subr.mxu0 0.0
  %286 = vmatpush1.msra.mxu0 0.0
  %287 = vmatprep.subr.mxu0 0.0
  %288 = vmatpush1.msra.mxu0 0.0
  %289 = vmatprep.subr.mxu0 0.0
  %290 = vmatpush1.msra.mxu0 0.0
  %291 = vmatprep.subr.mxu0 0.0
  %292 = vmatpush1.msra.mxu0 0.0
  %293 = vmatprep.subr.mxu0 0.0
  %294 = vmatpush1.msra.mxu0 0.0
  %295 = vmatprep.subr.mxu0 0.0
  %296 = vmatpush1.msra.mxu0 0.0
  %297 = vmatprep.subr.mxu0 0.0
  %298 = vmatpush1.msra.mxu0 0.0
  %299 = vmatprep.subr.mxu0 0.0
  %300 = vmatpush1.msra.mxu0 0.0
  %301 = vmatprep.subr.mxu0 0.0
  %302 = vmatpush1.msra.mxu0 0.0
  %303 = vmatprep.subr.mxu0 0.0
  %304 = vmatpush1.msra.mxu0 0.0
  %305 = vmatprep.subr.mxu0 0.0
  %306 = vmatpush1.msra.mxu0 0.0
  %307 = vmatprep.subr.mxu0 0.0
  %308 = vmatpush1.msra.mxu0 0.0
  %309 = vmatprep.subr.mxu0 0.0
  %310 = vmatpush1.msra.mxu0 0.0
  %311 = vmatprep.subr.mxu0 0.0
  %312 = vmatpush1.msra.mxu0 0.0
  %313 = vmatprep.subr.mxu0 0.0
  %314 = vmatpush1.msra.mxu0 0.0
  %315 = vmatprep.subr.mxu0 0.0
  %316 = vmatpush1.msra.mxu0 0.0
  %317 = vmatprep.subr.mxu0 0.0
  %318 = vmatpush1.msra.mxu0 0.0
  %319 = vmatprep.subr.mxu0 0.0
  %320 = vmatpush1.msra.mxu0 0.0
  %321 = vmatprep.mubr.f32.mxu0 0.0
  %322 = vmatmul.mubr.f32.gmra.mrb[0].mxu0 %v248
  %v323 = vpop.f32.mrb[0].mxu0
  %v324 = vadd.f32 0.0, %v323
  %v325 = vpop.f32.mrb[0].mxu0
  %326 = vmatprep.mubr.f32.mxu0 0.0
  %327 = vmatmul.mubr.f32.gmra.mrb[0].mxu0 %v251
  %v328 = vpop.f32.mrb[0].mxu0
  %v329 = vadd.f32 0.0, %v328
  %v330 = vpop.f32.mrb[0].mxu0
  %331 = vdwg.mxu0
  %v333 = vsel %vm197, %v240, 0
  %v336 = vsel %vm197, %v242, 0
  %v339 = vsel %vm253, %v246, 0
  %341 = vmatprep.subr.mxu0 0.0
  %342 = vmatpush1.msra.mxu0 %v245
  %343 = vmatprep.subr.mxu0 0.0
  %344 = vmatpush1.msra.mxu0 %v339
  %345 = vmatprep.subr.mxu0 0.0
  %346 = vmatpush1.msra.mxu0 0.0
  %347 = vmatprep.subr.mxu0 0.0
  %348 = vmatpush1.msra.mxu0 0.0
  %349 = vmatprep.subr.mxu0 0.0
  %350 = vmatpush1.msra.mxu0 0.0
  %351 = vmatprep.subr.mxu0 0.0
  %352 = vmatpush1.msra.mxu0 0.0
  %353 = vmatprep.subr.mxu0 0.0
  %354 = vmatpush1.msra.mxu0 0.0
  %355 = vmatprep.subr.mxu0 0.0
  %356 = vmatpush1.msra.mxu0 0.0
  %357 = vmatprep.subr.mxu0 0.0
  %358 = vmatpush1.msra.mxu0 0.0
  %359 = vmatprep.subr.mxu0 0.0
  %360 = vmatpush1.msra.mxu0 0.0
  %361 = vmatprep.subr.mxu0 0.0
  %362 = vmatpush1.msra.mxu0 0.0
  %363 = vmatprep.subr.mxu0 0.0
  %364 = vmatpush1.msra.mxu0 0.0
  %365 = vmatprep.subr.mxu0 0.0
  %366 = vmatpush1.msra.mxu0 0.0
  %367 = vmatprep.subr.mxu0 0.0
  %368 = vmatpush1.msra.mxu0 0.0
  %369 = vmatprep.subr.mxu0 0.0
  %370 = vmatpush1.msra.mxu0 0.0
  %371 = vmatprep.subr.mxu0 0.0
  %372 = vmatpush1.msra.mxu0 0.0
  %373 = vmatprep.subr.mxu0 0.0
  %374 = vmatpush1.msra.mxu0 0.0
  %375 = vmatprep.subr.mxu0 0.0
  %376 = vmatpush1.msra.mxu0 0.0
  %377 = vmatprep.subr.mxu0 0.0
  %378 = vmatpush1.msra.mxu0 0.0
  %379 = vmatprep.subr.mxu0 0.0
  %380 = vmatpush1.msra.mxu0 0.0
  %381 = vmatprep.subr.mxu0 0.0
  %382 = vmatpush1.msra.mxu0 0.0
  %383 = vmatprep.subr.mxu0 0.0
  %384 = vmatpush1.msra.mxu0 0.0
  %385 = vmatprep.subr.mxu0 0.0
  %386 = vmatpush1.msra.mxu0 0.0
  %387 = vmatprep.subr.mxu0 0.0
  %388 = vmatpush1.msra.mxu0 0.0
  %389 = vmatprep.subr.mxu0 0.0
  %390 = vmatpush1.msra.mxu0 0.0
  %391 = vmatprep.subr.mxu0 0.0
  %392 = vmatpush1.msra.mxu0 0.0
  %393 = vmatprep.subr.mxu0 0.0
  %394 = vmatpush1.msra.mxu0 0.0
  %395 = vmatprep.subr.mxu0 0.0
  %396 = vmatpush1.msra.mxu0 0.0
  %397 = vmatprep.subr.mxu0 0.0
  %398 = vmatpush1.msra.mxu0 0.0
  %399 = vmatprep.subr.mxu0 0.0
  %400 = vmatpush1.msra.mxu0 0.0
  %401 = vmatprep.subr.mxu0 0.0
  %402 = vmatpush1.msra.mxu0 0.0
  %403 = vmatprep.subr.mxu0 0.0
  %404 = vmatpush1.msra.mxu0 0.0
  %405 = vmatprep.mubr.f32.mxu0 0.0
  %406 = vmatmul.mubr.f32.gmra.mrb[0].mxu0 %v333
  %v407 = vpop.f32.mrb[0].mxu0
  %v408 = vadd.f32 0.0, %v407
  %v409 = vpop.f32.mrb[0].mxu0
  %410 = vmatprep.mubr.f32.mxu0 0.0
  %411 = vmatmul.mubr.f32.gmra.mrb[0].mxu0 %v336
  %v412 = vpop.f32.mrb[0].mxu0
  %v413 = vadd.f32 0.0, %v412
  %v414 = vpop.f32.mrb[0].mxu0
  %415 = vdwg.mxu0
  %416 = vst.msk [vmem:[%s3] sm:$0xff] %vm22, %v324
  %vm417 = vcmask 254976
  %418 = vst.msk [vmem:[%s3 + $0x8] sm:$0x3] %vm417, %v329
  %419 = vst.msk [vmem:[%s3 + $0x10] sm:$0xff] %vm22, %v408
  %420 = vst.msk [vmem:[%s3 + $0x18] sm:$0x3] %vm417, %v413
  // Predicated region
  $region14: #{tpu_custom_call.1} parent=0 // pred_check
    _
  $region15: #{tpu_custom_call.1} parent=0 // pred_check_branch
    %422 = sbr.rel (0) target = $region17
  $region16: #{tpu_custom_call.1} parent=0 // pred_region
    _
  $region17: #{tpu_custom_call.1} parent=0 // pred_fallthru
    _
  // Predicated region
  $region18: #{tpu_custom_call.1} parent=0 // pred_check
    _
  $region19: #{tpu_custom_call.1} parent=0 // pred_check_branch
    %424 = sbr.rel (0) target = $region21
  $region20: #{tpu_custom_call.1} parent=0 // pred_region
    _
  $region21: #{tpu_custom_call.1} parent=0 // pred_fallthru
    _

</llo_original>
